<compile_context>
chip_gen: v6e
topology: v6e:2x2x1
jax: 0.10.0
libtpu: 0.0.40
codegen_flags: <defaults>
</compile_context>

<pallas_src>
import functools

import jax
import jax.numpy as jnp
from jax.experimental import pallas as pl
from jax.experimental.pallas import tpu as pltpu


def _round_up(a, b):
    return (a + b - 1) // b * b


def _basic_block_kernel(x_ref, mask_ref, w1_ref, s1_ref, b1_ref,
                        w2_ref, s2_ref, b2_ref, out_ref, *, Wp, Eg, NPp):
    """Fused BasicBlock over the whole (small) batch in one invocation.

    x_ref:    (Cp, L)      f32   zero-padded, spatially-flattened NCHW batch;
                                 (sample n, padded pixel q) lives at lane Eg + n*P + q
    mask_ref: (1, NPp)     f32   1.0 at interior (non-padding) pixels, else 0.0
    w1_ref:   (Cp, 9*Cp)   bf16  conv1 weights, tap-major ((dy*3+dx)*Cp + ci)
    s1_ref/b1_ref: (Cp, 1) f32   folded BN1 scale / (BN1 bias + conv1 bias)
    w2_ref:   (Cp, 9*Cp)   bf16  conv2 weights
    s2_ref/b2_ref: (Cp, 1) f32   folded BN2 scale / bias
    out_ref:  (Cp, NPp)    f32   result in padded-flat coordinates (border / tail lanes
                                 are garbage; the wrapper slices out the interior)
    """
    src = x_ref[...]                       # (Cp, L) f32
    mask = mask_ref[...]                   # (1, NPp) f32

    def conv3x3(ext, w_flat):
        # In-kernel im2col: 9 statically shifted lane slices stacked on sublanes
        # (each slab is exactly Cp = 8k sublanes -> aligned concat), then one MXU
        # matmul (Cp, 9*Cp) @ (9*Cp, NPp) with f32 accumulation.
        slabs = []
        for dy in range(3):
            for dx in range(3):
                start = Eg + (dy - 1) * Wp + (dx - 1)
                slabs.append(ext[:, start:start + NPp])
        patches = jnp.concatenate(slabs, axis=0).astype(jnp.bfloat16)   # (9*Cp, NPp)
        return jnp.dot(w_flat, patches, preferred_element_type=jnp.float32)

    # conv1 -> BN1 -> ReLU ; zero padding/garbage lanes so conv2 sees proper zero-pad.
    y1 = conv3x3(src, w1_ref[...])
    y1 = jnp.maximum(y1 * s1_ref[...] + b1_ref[...], 0.0) * mask        # (Cp, NPp)

    # Re-extend with Eg guard lanes on each side (pure value op, no scratch round-trip).
    zpad = jnp.zeros((y1.shape[0], Eg), jnp.float32)
    mid = jnp.concatenate([zpad, y1, zpad], axis=1)                     # (Cp, L)

    # conv2 -> BN2 -> +identity -> ReLU (residual kept in f32; requires Cin == C).
    y2 = conv3x3(mid, w2_ref[...])
    identity = src[:, Eg:Eg + NPp]                 # padded input (zeros at borders)
    out = jnp.maximum(y2 * s2_ref[...] + b2_ref[...] + identity, 0.0)
    out_ref[...] = out.astype(out_ref.dtype)


@jax.jit
def basic_block_forward(x, w1_oihw, cb1, g1, be1, m1, v1,
                        w2_oihw, cb2, g2, be2, m2, v2, eps):
    """x: (N, Cin, H, W) NCHW.  Conv weights in PyTorch OIHW layout."""
    N, Cin, H, W = x.shape
    C = w1_oihw.shape[0]
    assert Cin == C, "stride=1 / downsample=None requires in_channels == out_channels"

    Cp = _round_up(C, 8)            # channel (sublane) padding
    Wp = W + 2                      # padded row width
    P = (H + 2) * Wp                # padded pixels per sample
    NP = N * P
    NPp = _round_up(NP, 128)        # lane padding -> unmasked stores
    E = Wp + 1                      # max |tap offset| = (W+2)+1
    Eg = _round_up(E, 128)          # guard lanes each side (aligned identity slice)
    L = Eg + NPp + Eg

    # Fold conv bias + inference BatchNorm into per-channel scale/bias (f32).
    s1 = g1 / jnp.sqrt(v1 + eps)
    b1 = be1 + (cb1 - m1) * s1
    s2 = g2 / jnp.sqrt(v2 + eps)
    b2 = be2 + (cb2 - m2) * s2

    # OIHW -> (Cp, 9*Cp), tap-major, padded channels zeroed, matching the in-kernel
    # im2col row order; bf16 for the MXU.
    def pad_w(w):
        wt = jnp.transpose(w, (0, 2, 3, 1))                     # (C, 3, 3, Cin)
        wt = jnp.pad(wt, ((0, Cp - C), (0, 0), (0, 0), (0, Cp - C)))
        return wt.reshape(Cp, 9 * Cp).astype(jnp.bfloat16)

    def pad_cvec(v):
        return jnp.pad(v.astype(jnp.float32), (0, Cp - C)).reshape(Cp, 1)

    w1f, w2f = pad_w(w1_oihw), pad_w(w2_oihw)

    # Channels on sublanes, (batch x padded-spatial) on lanes, +Eg guard lanes per side.
    xpad = jnp.pad(x.astype(jnp.float32),
                   ((0, 0), (0, Cp - C), (1, 1), (1, 1)))        # (N, Cp, H+2, Wp)
    x_flat = jnp.transpose(xpad, (1, 0, 2, 3)).reshape(Cp, NP)
    x_all = jnp.pad(x_flat, ((0, 0), (Eg, Eg + NPp - NP)))       # (Cp, L)
    assert x_all.shape == (Cp, L)

    # Interior-pixel mask in padded-flat coordinates (computed once in the wrapper).
    q = jnp.arange(NPp, dtype=jnp.int32)
    qm = q % P
    row, col = qm // Wp, qm % Wp
    mask = ((q < NP) & (row >= 1) & (row <= H) & (col >= 1) & (col <= W)
            ).astype(jnp.float32)[None, :]

    kernel = functools.partial(_basic_block_kernel, Wp=Wp, Eg=Eg, NPp=NPp)
    vmem = pl.BlockSpec(memory_space=pltpu.MemorySpace.VMEM)
    out_flat = pl.pallas_call(
        kernel,
        out_shape=jax.ShapeDtypeStruct((Cp, NPp), jnp.float32),
        in_specs=[vmem] * 8,
        out_specs=vmem,
    )(x_all, mask,
      w1f, pad_cvec(s1), pad_cvec(b1),
      w2f, pad_cvec(s2), pad_cvec(b2))

    # (Cp, NPp) -> drop channel/lane padding and spatial borders -> NCHW.
    out = (out_flat[:C, :NP].reshape(C, N, H + 2, Wp)
           .transpose(1, 0, 2, 3)[:, :, 1:H + 1, 1:W + 1])
    return out


# ---------------------------- reference (plain JAX, f32) ----------------------------
def _ref_forward(x, wc1, cb1, g1, be1, m1, v1, wc2, cb2, g2, be2, m2, v2, eps):
    def conv(x, w, b):
        y = jax.lax.conv_general_dilated(
            x, w, (1, 1), 'SAME', dimension_numbers=('NCHW', 'OIHW', 'NCHW'))
        return y + b[None, :, None, None]

    def bn(x, g, be, m, v):
        return ((x - m[None, :, None, None])
                / jnp.sqrt(v[None, :, None, None] + eps)
                * g[None, :, None, None] + be[None, :, None, None])

    out = jax.nn.relu(bn(conv(x, wc1, cb1), g1, be1, m1, v1))
    out = bn(conv(out, wc2, cb2), g2, be2, m2, v2)
    return jax.nn.relu(out + x)


if __name__ == "__main__":
    # Small shapes consistent with the module (input_channel == output_channel since
    # downsample is None).
    N, C, H, W = 2, 4, 16, 16
    eps = 1e-5

    key = jax.random.PRNGKey(0)
    kx, kw1, kb1, kw2, kb2 = jax.random.split(key, 5)

    x = jax.random.normal(kx, (N, C, H, W), jnp.float32)

    # conv weights in PyTorch OIHW layout (+ conv biases, nn.Conv2d default bias=True)
    wc1 = jax.random.normal(kw1, (C, C, 3, 3), jnp.float32) * 0.1
    cb1 = jax.random.normal(kb1, (C,), jnp.float32) * 0.05
    wc2 = jax.random.normal(kw2, (C, C, 3, 3), jnp.float32) * 0.1
    cb2 = jax.random.normal(kb2, (C,), jnp.float32) * 0.05

    # deterministic BatchNorm (inference) parameters
    ar = jnp.arange(C, dtype=jnp.float32)
    g1, be1 = 1.0 + 0.10 * ar, 0.02 * ar
    m1, v1 = 0.05 * ar, 1.0 + 0.03 * ar
    g2, be2 = 1.0 - 0.05 * ar, -0.01 * ar
    m2, v2 = -0.04 * ar, 1.0 + 0.02 * ar

    out = basic_block_forward(x, wc1, cb1, g1, be1, m1, v1,
                              wc2, cb2, g2, be2, m2, v2, eps)
    out = jax.block_until_ready(out)

    ref = _ref_forward(x, wc1, cb1, g1, be1, m1, v1, wc2, cb2, g2, be2, m2, v2, eps)
    ref = jax.block_until_ready(ref)

    assert out.shape == (N, C, H, W)
    # Matmul operands are bf16 (f32 accumulation; scale/bias/residual in f32), so the
    # tolerance vs. the pure-f32 reference is correspondingly looser.
    assert jnp.allclose(out, ref, rtol=3e-2, atol=3e-2), (
        float(jnp.max(jnp.abs(out - ref))))
    print("KERNEL_OK")
</pallas_src>

<mosaic_0001>
module attributes {stable_mosaic.version = 11 : i64} {
  func.func @_basic_block_kernel(%arg0: memref<8x1024xf32, #tpu.memory_space<vmem>>, %arg1: memref<1x768xf32, #tpu.memory_space<vmem>>, %arg2: memref<8x72xbf16, #tpu.memory_space<vmem>>, %arg3: memref<8x1xf32, #tpu.memory_space<vmem>>, %arg4: memref<8x1xf32, #tpu.memory_space<vmem>>, %arg5: memref<8x72xbf16, #tpu.memory_space<vmem>>, %arg6: memref<8x1xf32, #tpu.memory_space<vmem>>, %arg7: memref<8x1xf32, #tpu.memory_space<vmem>>, %arg8: memref<8x768xf32, #tpu.memory_space<vmem>>) attributes {dimension_semantics = [], scalar_prefetch = 0 : i64, scratch_operands = 0 : i64, tpu.core_type = #tpu.core_type<tc>} {
    %c0 = arith.constant 0 : index
    %c0_0 = arith.constant 0 : index
    %0 = vector.load %arg0[%c0, %c0_0] : memref<8x1024xf32, #tpu.memory_space<vmem>>, vector<8x1024xf32>
    %c0_1 = arith.constant 0 : index
    %c0_2 = arith.constant 0 : index
    %1 = vector.load %arg1[%c0_1, %c0_2] : memref<1x768xf32, #tpu.memory_space<vmem>>, vector<1x768xf32>
    %c0_3 = arith.constant 0 : index
    %c0_4 = arith.constant 0 : index
    %2 = vector.load %arg2[%c0_3, %c0_4] : memref<8x72xbf16, #tpu.memory_space<vmem>>, vector<8x72xbf16>
    %3 = vector.extract_strided_slice %0 {offsets = [0, 109], sizes = [8, 768], strides = [1, 1]} : vector<8x1024xf32> to vector<8x768xf32>
    %4 = vector.extract_strided_slice %0 {offsets = [0, 110], sizes = [8, 768], strides = [1, 1]} : vector<8x1024xf32> to vector<8x768xf32>
    %5 = vector.extract_strided_slice %0 {offsets = [0, 111], sizes = [8, 768], strides = [1, 1]} : vector<8x1024xf32> to vector<8x768xf32>
    %6 = vector.extract_strided_slice %0 {offsets = [0, 127], sizes = [8, 768], strides = [1, 1]} : vector<8x1024xf32> to vector<8x768xf32>
    %7 = vector.extract_strided_slice %0 {offsets = [0, 128], sizes = [8, 768], strides = [1, 1]} : vector<8x1024xf32> to vector<8x768xf32>
    %8 = vector.extract_strided_slice %0 {offsets = [0, 129], sizes = [8, 768], strides = [1, 1]} : vector<8x1024xf32> to vector<8x768xf32>
    %9 = vector.extract_strided_slice %0 {offsets = [0, 145], sizes = [8, 768], strides = [1, 1]} : vector<8x1024xf32> to vector<8x768xf32>
    %10 = vector.extract_strided_slice %0 {offsets = [0, 146], sizes = [8, 768], strides = [1, 1]} : vector<8x1024xf32> to vector<8x768xf32>
    %11 = vector.extract_strided_slice %0 {offsets = [0, 147], sizes = [8, 768], strides = [1, 1]} : vector<8x1024xf32> to vector<8x768xf32>
    %12 = tpu.concatenate %3, %4, %5, %6, %7, %8, %9, %10, %11 in 0 : vector<8x768xf32>, vector<8x768xf32>, vector<8x768xf32>, vector<8x768xf32>, vector<8x768xf32>, vector<8x768xf32>, vector<8x768xf32>, vector<8x768xf32>, vector<8x768xf32> -> vector<72x768xf32>
    %13 = arith.truncf %12 : vector<72x768xf32> to vector<72x768xbf16>
    %cst = arith.constant dense<0.000000e+00> : vector<8x768xf32>
    %14 = tpu.matmul %2, %13, %cst {dimension_numbers = #tpu.dot_dimension_numbers<[1], [0], [0], [1], [0, 0, 1, 1], [], []>} : vector<8x72xbf16>, vector<72x768xbf16>, vector<8x768xf32> -> vector<8x768xf32>
    %c0_5 = arith.constant 0 : index
    %c0_6 = arith.constant 0 : index
    %15 = vector.load %arg3[%c0_5, %c0_6] : memref<8x1xf32, #tpu.memory_space<vmem>>, vector<8x1xf32>
    %16 = vector.broadcast %15 : vector<8x1xf32> to vector<8x768xf32>
    %17 = arith.mulf %14, %16 : vector<8x768xf32>
    %c0_7 = arith.constant 0 : index
    %c0_8 = arith.constant 0 : index
    %18 = vector.load %arg4[%c0_7, %c0_8] : memref<8x1xf32, #tpu.memory_space<vmem>>, vector<8x1xf32>
    %19 = vector.broadcast %18 : vector<8x1xf32> to vector<8x768xf32>
    %20 = arith.addf %17, %19 : vector<8x768xf32>
    %cst_9 = arith.constant 0.000000e+00 : f32
    %21 = vector.broadcast %cst_9 : f32 to vector<8x768xf32>
    %22 = arith.maximumf %20, %21 : vector<8x768xf32>
    %23 = vector.broadcast %1 : vector<1x768xf32> to vector<8x768xf32>
    %24 = arith.mulf %22, %23 : vector<8x768xf32>
    %cst_10 = arith.constant 0.000000e+00 : f32
    %25 = vector.broadcast %cst_10 : f32 to vector<8x128xf32>
    %26 = tpu.concatenate %25, %24, %25 in 1 : vector<8x128xf32>, vector<8x768xf32>, vector<8x128xf32> -> vector<8x1024xf32>
    %c0_11 = arith.constant 0 : index
    %c0_12 = arith.constant 0 : index
    %27 = vector.load %arg5[%c0_11, %c0_12] : memref<8x72xbf16, #tpu.memory_space<vmem>>, vector<8x72xbf16>
    %28 = vector.extract_strided_slice %26 {offsets = [0, 109], sizes = [8, 768], strides = [1, 1]} : vector<8x1024xf32> to vector<8x768xf32>
    %29 = vector.extract_strided_slice %26 {offsets = [0, 110], sizes = [8, 768], strides = [1, 1]} : vector<8x1024xf32> to vector<8x768xf32>
    %30 = vector.extract_strided_slice %26 {offsets = [0, 111], sizes = [8, 768], strides = [1, 1]} : vector<8x1024xf32> to vector<8x768xf32>
    %31 = vector.extract_strided_slice %26 {offsets = [0, 127], sizes = [8, 768], strides = [1, 1]} : vector<8x1024xf32> to vector<8x768xf32>
    %32 = vector.extract_strided_slice %26 {offsets = [0, 128], sizes = [8, 768], strides = [1, 1]} : vector<8x1024xf32> to vector<8x768xf32>
    %33 = vector.extract_strided_slice %26 {offsets = [0, 129], sizes = [8, 768], strides = [1, 1]} : vector<8x1024xf32> to vector<8x768xf32>
    %34 = vector.extract_strided_slice %26 {offsets = [0, 145], sizes = [8, 768], strides = [1, 1]} : vector<8x1024xf32> to vector<8x768xf32>
    %35 = vector.extract_strided_slice %26 {offsets = [0, 146], sizes = [8, 768], strides = [1, 1]} : vector<8x1024xf32> to vector<8x768xf32>
    %36 = vector.extract_strided_slice %26 {offsets = [0, 147], sizes = [8, 768], strides = [1, 1]} : vector<8x1024xf32> to vector<8x768xf32>
    %37 = tpu.concatenate %28, %29, %30, %31, %32, %33, %34, %35, %36 in 0 : vector<8x768xf32>, vector<8x768xf32>, vector<8x768xf32>, vector<8x768xf32>, vector<8x768xf32>, vector<8x768xf32>, vector<8x768xf32>, vector<8x768xf32>, vector<8x768xf32> -> vector<72x768xf32>
    %38 = arith.truncf %37 : vector<72x768xf32> to vector<72x768xbf16>
    %cst_13 = arith.constant dense<0.000000e+00> : vector<8x768xf32>
    %39 = tpu.matmul %27, %38, %cst_13 {dimension_numbers = #tpu.dot_dimension_numbers<[1], [0], [0], [1], [0, 0, 1, 1], [], []>} : vector<8x72xbf16>, vector<72x768xbf16>, vector<8x768xf32> -> vector<8x768xf32>
    %40 = vector.extract_strided_slice %0 {offsets = [0, 128], sizes = [8, 768], strides = [1, 1]} : vector<8x1024xf32> to vector<8x768xf32>
    %c0_14 = arith.constant 0 : index
    %c0_15 = arith.constant 0 : index
    %41 = vector.load %arg6[%c0_14, %c0_15] : memref<8x1xf32, #tpu.memory_space<vmem>>, vector<8x1xf32>
    %42 = vector.broadcast %41 : vector<8x1xf32> to vector<8x768xf32>
    %43 = arith.mulf %39, %42 : vector<8x768xf32>
    %c0_16 = arith.constant 0 : index
    %c0_17 = arith.constant 0 : index
    %44 = vector.load %arg7[%c0_16, %c0_17] : memref<8x1xf32, #tpu.memory_space<vmem>>, vector<8x1xf32>
    %45 = vector.broadcast %44 : vector<8x1xf32> to vector<8x768xf32>
    %46 = arith.addf %43, %45 : vector<8x768xf32>
    %47 = arith.addf %46, %40 : vector<8x768xf32>
    %cst_18 = arith.constant 0.000000e+00 : f32
    %48 = vector.broadcast %cst_18 : f32 to vector<8x768xf32>
    %49 = arith.maximumf %47, %48 : vector<8x768xf32>
    %c0_19 = arith.constant 0 : index
    %c0_20 = arith.constant 0 : index
    %50 = vector.load %arg8[%c0_19, %c0_20] : memref<8x768xf32, #tpu.memory_space<vmem>>, vector<8x768xf32>
    tpu.vector_store %arg8[%c0_19, %c0_20], %49 {strides = array<i32>} : memref<8x768xf32, #tpu.memory_space<vmem>>, vector<8x768xf32>,
    return
  }
}

</mosaic_0001>

<llo_original>
// kernel: basic_block_forward.1
$region0: #{basic_block_forward.1}
  #allocation0 [shape = 'u32[]', space=smem, size = 0x4, offset = 0x4, fixed_abs, tag = 'smem constant byte address 0x4 - core index']
  #allocation1 [shape = 'u32[144,128]{1,0:T(1,128)}', space=vmem, size = 0x12000, scoped, tag = 'internal scratch']
  %s0 = inlined_call_operand.vmem [shape: f32[8,1024], index: 0, kind: input, shape index: {}]
  %s1 = inlined_call_operand.vmem [shape: f32[1,768], index: 1, kind: input, shape index: {}]
  %s2 = inlined_call_operand.vmem [shape: bf16[8,72], index: 2, kind: input, shape index: {}]
  %s3 = inlined_call_operand.vmem [shape: f32[8,1], index: 3, kind: input, shape index: {}]
  %s4 = inlined_call_operand.vmem [shape: f32[8,1], index: 4, kind: input, shape index: {}]
  %s5 = inlined_call_operand.vmem [shape: bf16[8,72], index: 5, kind: input, shape index: {}]
  %s6 = inlined_call_operand.vmem [shape: f32[8,1], index: 6, kind: input, shape index: {}]
  %s7 = inlined_call_operand.vmem [shape: f32[8,1], index: 7, kind: input, shape index: {}]
  %s8 = inlined_call_operand.vmem [shape: f32[8,768], index: 8, kind: output, shape index: {}]
  %s9 = sld [smem:[#allocation0]]
  $region42: #{basic_block_forward.1} parent=0
    _
  %s11 = ssub.s32 1, %s9
  %s12 = scalar_select 0, %s11, %s9
  // Predicated region
  $region2: #{basic_block_forward.1} parent=0 // pred_check
    _
  $region3: #{basic_block_forward.1} parent=0 // pred_check_branch
    %14 = sbr.rel (0) target = $region5
  $region4: #{basic_block_forward.1} parent=0 // pred_region
    _
  $region5: #{basic_block_forward.1} parent=0 // pred_fallthru
    _
  // Predicated region
  $region6: #{basic_block_forward.1} parent=0 // pred_check
    _
  $region7: #{basic_block_forward.1} parent=0 // pred_check_branch
    %16 = sbr.rel (0) target = $region9
  $region8: #{basic_block_forward.1} parent=0 // pred_region
    _
  $region9: #{basic_block_forward.1} parent=0 // pred_fallthru
    _
  // Predicated region
  $region10: #{basic_block_forward.1} parent=0 // pred_check
    _
  $region11: #{basic_block_forward.1} parent=0 // pred_check_branch
    %18 = sbr.rel (0) target = $region13
  $region12: #{basic_block_forward.1} parent=0 // pred_region
    _
  $region13: #{basic_block_forward.1} parent=0 // pred_fallthru
    _
  // Predicated region
  $region14: #{basic_block_forward.1} parent=0 // pred_check
    _
  $region15: #{basic_block_forward.1} parent=0 // pred_check_branch
    %20 = sbr.rel (0) target = $region17
  $region16: #{basic_block_forward.1} parent=0 // pred_region
    _
  $region17: #{basic_block_forward.1} parent=0 // pred_fallthru
    _
  // Predicated region
  $region18: #{basic_block_forward.1} parent=0 // pred_check
    _
  $region19: #{basic_block_forward.1} parent=0 // pred_check_branch
    %22 = sbr.rel (0) target = $region21
  $region20: #{basic_block_forward.1} parent=0 // pred_region
    _
  $region21: #{basic_block_forward.1} parent=0 // pred_fallthru
    _
  // Predicated region
  $region22: #{basic_block_forward.1} parent=0 // pred_check
    _
  $region23: #{basic_block_forward.1} parent=0 // pred_check_branch
    %24 = sbr.rel (0) target = $region25
  $region24: #{basic_block_forward.1} parent=0 // pred_region
    _
  $region25: #{basic_block_forward.1} parent=0 // pred_fallthru
    _
  // Predicated region
  $region26: #{basic_block_forward.1} parent=0 // pred_check
    _
  $region27: #{basic_block_forward.1} parent=0 // pred_check_branch
    %26 = sbr.rel (0) target = $region29
  $region28: #{basic_block_forward.1} parent=0 // pred_region
    _
  $region29: #{basic_block_forward.1} parent=0 // pred_fallthru
    _
  // Predicated region
  $region30: #{basic_block_forward.1} parent=0 // pred_check
    _
  $region31: #{basic_block_forward.1} parent=0 // pred_check_branch
    %28 = sbr.rel (0) target = $region33
  $region32: #{basic_block_forward.1} parent=0 // pred_region
    _
  $region33: #{basic_block_forward.1} parent=0 // pred_fallthru
    _
  %v30 = vld [vmem:[%s0] sm:$0xff]
  %v31 = vld [vmem:[%s0 + $0x8] sm:$0xff]
  %v32 = vld [vmem:[%s0 + $0x10] sm:$0xff]
  %v33 = vld [vmem:[%s0 + $0x18] sm:$0xff]
  %v34 = vld [vmem:[%s0 + $0x20] sm:$0xff]
  %v35 = vld [vmem:[%s0 + $0x28] sm:$0xff]
  %v36 = vld [vmem:[%s0 + $0x30] sm:$0xff]
  %v37 = vld [vmem:[%s0 + $0x38] sm:$0xff]
  %v38 = vld [vmem:[%s1] sm:$0x3f]
  %v39 = vld [vmem:[%s2] sm:$0xf]
  %47 = vrot.lane.b32.xlu0 %v30, 127
  %v48 = vpop.permute.xlu0 %47
  %49 = vrot.lane.b32.xlu0 %v31, 127
  %v50 = vpop.permute.xlu0 %49
  %51 = vrot.lane.b32.xlu0 %v32, 127
  %v52 = vpop.permute.xlu0 %51
  %53 = vrot.lane.b32.xlu0 %v33, 127
  %v54 = vpop.permute.xlu0 %53
  %55 = vrot.lane.b32.xlu0 %v34, 127
  %v56 = vpop.permute.xlu0 %55
  %57 = vrot.lane.b32.xlu0 %v35, 127
  %v58 = vpop.permute.xlu0 %57
  %59 = vrot.lane.b32.xlu0 %v36, 127
  %v60 = vpop.permute.xlu0 %59
  %vm61 = vcmask 1039360
  %v62 = vsel %vm61, %v48, %v50
  %v63 = vsel %vm61, %v50, %v52
  %v64 = vsel %vm61, %v52, %v54
  %v65 = vsel %vm61, %v54, %v56
  %v66 = vsel %vm61, %v56, %v58
  %v67 = vsel %vm61, %v58, %v60
  %75 = vrot.lane.b32.xlu0 %v30, 126
  %v76 = vpop.permute.xlu0 %75
  %77 = vrot.lane.b32.xlu0 %v31, 126
  %v78 = vpop.permute.xlu0 %77
  %79 = vrot.lane.b32.xlu0 %v32, 126
  %v80 = vpop.permute.xlu0 %79
  %81 = vrot.lane.b32.xlu0 %v33, 126
  %v82 = vpop.permute.xlu0 %81
  %83 = vrot.lane.b32.xlu0 %v34, 126
  %v84 = vpop.permute.xlu0 %83
  %85 = vrot.lane.b32.xlu0 %v35, 126
  %v86 = vpop.permute.xlu0 %85
  %87 = vrot.lane.b32.xlu0 %v36, 126
  %v88 = vpop.permute.xlu0 %87
  %vm89 = vcmask 1031168
  %v90 = vsel %vm89, %v76, %v78
  %v91 = vsel %vm89, %v78, %v80
  %v92 = vsel %vm89, %v80, %v82
  %v93 = vsel %vm89, %v82, %v84
  %v94 = vsel %vm89, %v84, %v86
  %v95 = vsel %vm89, %v86, %v88
  %103 = vrot.lane.b32.xlu0 %v30, 110
  %v104 = vpop.permute.xlu0 %103
  %105 = vrot.lane.b32.xlu0 %v31, 110
  %v106 = vpop.permute.xlu0 %105
  %107 = vrot.lane.b32.xlu0 %v32, 110
  %v108 = vpop.permute.xlu0 %107
  %109 = vrot.lane.b32.xlu0 %v33, 110
  %v110 = vpop.permute.xlu0 %109
  %111 = vrot.lane.b32.xlu0 %v34, 110
  %v112 = vpop.permute.xlu0 %111
  %113 = vrot.lane.b32.xlu0 %v35, 110
  %v114 = vpop.permute.xlu0 %113
  %115 = vrot.lane.b32.xlu0 %v36, 110
  %v116 = vpop.permute.xlu0 %115
  %vm117 = vcmask 900096
  %v118 = vsel %vm117, %v104, %v106
  %v119 = vsel %vm117, %v106, %v108
  %v120 = vsel %vm117, %v108, %v110
  %v121 = vsel %vm117, %v110, %v112
  %v122 = vsel %vm117, %v112, %v114
  %v123 = vsel %vm117, %v114, %v116
  %131 = vrot.lane.b32.xlu0 %v31, 109
  %v132 = vpop.permute.xlu0 %131
  %133 = vrot.lane.b32.xlu0 %v32, 109
  %v134 = vpop.permute.xlu0 %133
  %135 = vrot.lane.b32.xlu0 %v33, 109
  %v136 = vpop.permute.xlu0 %135
  %137 = vrot.lane.b32.xlu0 %v34, 109
  %v138 = vpop.permute.xlu0 %137
  %139 = vrot.lane.b32.xlu0 %v35, 109
  %v140 = vpop.permute.xlu0 %139
  %141 = vrot.lane.b32.xlu0 %v36, 109
  %v142 = vpop.permute.xlu0 %141
  %vm143 = vcmask 891904
  %v144 = vsel %vm143, %v132, %v134
  %v145 = vsel %vm143, %v134, %v136
  %v146 = vsel %vm143, %v136, %v138
  %v147 = vsel %vm143, %v138, %v140
  %v148 = vsel %vm143, %v140, %v142
  %157 = vrot.lane.b32.xlu0 %v31, 108
  %v158 = vpop.permute.xlu0 %157
  %159 = vrot.lane.b32.xlu0 %v32, 108
  %v160 = vpop.permute.xlu0 %159
  %161 = vrot.lane.b32.xlu0 %v33, 108
  %v162 = vpop.permute.xlu0 %161
  %163 = vrot.lane.b32.xlu0 %v34, 108
  %v164 = vpop.permute.xlu0 %163
  %165 = vrot.lane.b32.xlu0 %v35, 108
  %v166 = vpop.permute.xlu0 %165
  %167 = vrot.lane.b32.xlu0 %v36, 108
  %v168 = vpop.permute.xlu0 %167
  %169 = vrot.lane.b32.xlu0 %v37, 108
  %v170 = vpop.permute.xlu0 %169
  %vm171 = vcmask 883712
  %v172 = vsel %vm171, %v158, %v160
  %v173 = vsel %vm171, %v160, %v162
  %v174 = vsel %vm171, %v162, %v164
  %v175 = vsel %vm171, %v164, %v166
  %v176 = vsel %vm171, %v166, %v168
  %v177 = vsel %vm171, %v168, %v170
  %185 = vrot.lane.b32.xlu0 %v31, 92
  %v186 = vpop.permute.xlu0 %185
  %187 = vrot.lane.b32.xlu0 %v32, 92
  %v188 = vpop.permute.xlu0 %187
  %189 = vrot.lane.b32.xlu0 %v33, 92
  %v190 = vpop.permute.xlu0 %189
  %191 = vrot.lane.b32.xlu0 %v34, 92
  %v192 = vpop.permute.xlu0 %191
  %193 = vrot.lane.b32.xlu0 %v35, 92
  %v194 = vpop.permute.xlu0 %193
  %195 = vrot.lane.b32.xlu0 %v36, 92
  %v196 = vpop.permute.xlu0 %195
  %197 = vrot.lane.b32.xlu0 %v37, 92
  %v198 = vpop.permute.xlu0 %197
  %vm199 = vcmask 752640
  %v200 = vsel %vm199, %v186, %v188
  %v201 = vsel %vm199, %v188, %v190
  %v202 = vsel %vm199, %v190, %v192
  %v203 = vsel %vm199, %v192, %v194
  %v204 = vsel %vm199, %v194, %v196
  %v205 = vsel %vm199, %v196, %v198
  %213 = vrot.lane.b32.xlu0 %v31, 91
  %v214 = vpop.permute.xlu0 %213
  %215 = vrot.lane.b32.xlu0 %v32, 91
  %v216 = vpop.permute.xlu0 %215
  %217 = vrot.lane.b32.xlu0 %v33, 91
  %v218 = vpop.permute.xlu0 %217
  %219 = vrot.lane.b32.xlu0 %v34, 91
  %v220 = vpop.permute.xlu0 %219
  %221 = vrot.lane.b32.xlu0 %v35, 91
  %v222 = vpop.permute.xlu0 %221
  %223 = vrot.lane.b32.xlu0 %v36, 91
  %v224 = vpop.permute.xlu0 %223
  %225 = vrot.lane.b32.xlu0 %v37, 91
  %v226 = vpop.permute.xlu0 %225
  %vm227 = vcmask 744448
  %v228 = vsel %vm227, %v214, %v216
  %v229 = vsel %vm227, %v216, %v218
  %v230 = vsel %vm227, %v218, %v220
  %v231 = vsel %vm227, %v220, %v222
  %v232 = vsel %vm227, %v222, %v224
  %v233 = vsel %vm227, %v224, %v226
  %241 = vrot.lane.b32.xlu0 %v31, 90
  %v242 = vpop.permute.xlu0 %241
  %243 = vrot.lane.b32.xlu0 %v32, 90
  %v244 = vpop.permute.xlu0 %243
  %245 = vrot.lane.b32.xlu0 %v33, 90
  %v246 = vpop.permute.xlu0 %245
  %247 = vrot.lane.b32.xlu0 %v34, 90
  %v248 = vpop.permute.xlu0 %247
  %249 = vrot.lane.b32.xlu0 %v35, 90
  %v250 = vpop.permute.xlu0 %249
  %251 = vrot.lane.b32.xlu0 %v36, 90
  %v252 = vpop.permute.xlu0 %251
  %253 = vrot.lane.b32.xlu0 %v37, 90
  %v254 = vpop.permute.xlu0 %253
  %vm255 = vcmask 736256
  %v256 = vsel %vm255, %v242, %v244
  %v257 = vsel %vm255, %v244, %v246
  %v258 = vsel %vm255, %v246, %v248
  %v259 = vsel %vm255, %v248, %v250
  %v260 = vsel %vm255, %v250, %v252
  %v261 = vsel %vm255, %v252, %v254
  %v269 = vpack.c.bf16 %v62, %v30
  %v270 = vpack.c.bf16 %v63, %v31
  %v271 = vpack.c.bf16 %v64, %v32
  %v272 = vpack.c.bf16 %v65, %v33
  %v273 = vpack.c.bf16 %v66, %v34
  %v274 = vpack.c.bf16 %v67, %v35
  %v275 = vpack.c.bf16 %v60, %v36
  %v276 = vpack.c.bf16 %v118, %v90
  %v277 = vpack.c.bf16 %v119, %v91
  %v278 = vpack.c.bf16 %v120, %v92
  %v279 = vpack.c.bf16 %v121, %v93
  %v280 = vpack.c.bf16 %v122, %v94
  %v281 = vpack.c.bf16 %v123, %v95
  %v282 = vpack.c.bf16 %v116, %v88
  %v283 = vpack.c.bf16 %v158, %v132
  %v284 = vpack.c.bf16 %v172, %v144
  %v285 = vpack.c.bf16 %v173, %v145
  %v286 = vpack.c.bf16 %v174, %v146
  %v287 = vpack.c.bf16 %v175, %v147
  %v288 = vpack.c.bf16 %v176, %v148
  %v289 = vpack.c.bf16 %v177, %v142
  %v290 = vpack.c.bf16 %v214, %v186
  %v291 = vpack.c.bf16 %v228, %v200
  %v292 = vpack.c.bf16 %v229, %v201
  %v293 = vpack.c.bf16 %v230, %v202
  %v294 = vpack.c.bf16 %v231, %v203
  %v295 = vpack.c.bf16 %v232, %v204
  %v296 = vpack.c.bf16 %v233, %v205
  %v297 = vpack.c.bf16 %v242, %v242
  %v298 = vpack.c.bf16 %v256, %v256
  %v299 = vpack.c.bf16 %v257, %v257
  %v300 = vpack.c.bf16 %v258, %v258
  %v301 = vpack.c.bf16 %v259, %v259
  %v302 = vpack.c.bf16 %v260, %v260
  %v303 = vpack.c.bf16 %v261, %v261
  %339 = vrot.lane.b32.xlu0 %v269, 19
  %v340 = vpop.permute.xlu0 %339
  %341 = vrot.lane.b32.xlu0 %v270, 19
  %v342 = vpop.permute.xlu0 %341
  %343 = vrot.lane.b32.xlu0 %v271, 19
  %v344 = vpop.permute.xlu0 %343
  %345 = vrot.lane.b32.xlu0 %v272, 19
  %v346 = vpop.permute.xlu0 %345
  %347 = vrot.lane.b32.xlu0 %v273, 19
  %v348 = vpop.permute.xlu0 %347
  %349 = vrot.lane.b32.xlu0 %v274, 19
  %v350 = vpop.permute.xlu0 %349
  %351 = vrot.lane.b32.xlu0 %v275, 19
  %v352 = vpop.permute.xlu0 %351
  %353 = vrot.lane.b32.xlu0 %v276, 19
  %v354 = vpop.permute.xlu0 %353
  %355 = vrot.lane.b32.xlu0 %v277, 19
  %v356 = vpop.permute.xlu0 %355
  %357 = vrot.lane.b32.xlu0 %v278, 19
  %v358 = vpop.permute.xlu0 %357
  %359 = vrot.lane.b32.xlu0 %v279, 19
  %v360 = vpop.permute.xlu0 %359
  %361 = vrot.lane.b32.xlu0 %v280, 19
  %v362 = vpop.permute.xlu0 %361
  %363 = vrot.lane.b32.xlu0 %v281, 19
  %v364 = vpop.permute.xlu0 %363
  %365 = vrot.lane.b32.xlu0 %v282, 19
  %v366 = vpop.permute.xlu0 %365
  %367 = vrot.lane.b32.xlu0 %v283, 19
  %v368 = vpop.permute.xlu0 %367
  %369 = vrot.lane.b32.xlu0 %v284, 19
  %v370 = vpop.permute.xlu0 %369
  %371 = vrot.lane.b32.xlu0 %v285, 19
  %v372 = vpop.permute.xlu0 %371
  %373 = vrot.lane.b32.xlu0 %v286, 19
  %v374 = vpop.permute.xlu0 %373
  %375 = vrot.lane.b32.xlu0 %v287, 19
  %v376 = vpop.permute.xlu0 %375
  %377 = vrot.lane.b32.xlu0 %v288, 19
  %v378 = vpop.permute.xlu0 %377
  %379 = vrot.lane.b32.xlu0 %v289, 19
  %v380 = vpop.permute.xlu0 %379
  %381 = vrot.lane.b32.xlu0 %v290, 19
  %v382 = vpop.permute.xlu0 %381
  %383 = vrot.lane.b32.xlu0 %v291, 19
  %v384 = vpop.permute.xlu0 %383
  %385 = vrot.lane.b32.xlu0 %v292, 19
  %v386 = vpop.permute.xlu0 %385
  %387 = vrot.lane.b32.xlu0 %v293, 19
  %v388 = vpop.permute.xlu0 %387
  %389 = vrot.lane.b32.xlu0 %v294, 19
  %v390 = vpop.permute.xlu0 %389
  %391 = vrot.lane.b32.xlu0 %v295, 19
  %v392 = vpop.permute.xlu0 %391
  %393 = vrot.lane.b32.xlu0 %v296, 19
  %v394 = vpop.permute.xlu0 %393
  %395 = vrot.lane.b32.xlu0 %v297, 19
  %v396 = vpop.permute.xlu0 %395
  %397 = vrot.lane.b32.xlu0 %v298, 19
  %v398 = vpop.permute.xlu0 %397
  %399 = vrot.lane.b32.xlu0 %v299, 19
  %v400 = vpop.permute.xlu0 %399
  %401 = vrot.lane.b32.xlu0 %v300, 19
  %v402 = vpop.permute.xlu0 %401
  %403 = vrot.lane.b32.xlu0 %v301, 19
  %v404 = vpop.permute.xlu0 %403
  %405 = vrot.lane.b32.xlu0 %v302, 19
  %v406 = vpop.permute.xlu0 %405
  %407 = vrot.lane.b32.xlu0 %v303, 19
  %v408 = vpop.permute.xlu0 %407
  %vm409 = vcmask 154624
  %v410 = vsel %vm409, %v340, %v342
  %v411 = vsel %vm409, %v342, %v344
  %v412 = vsel %vm409, %v344, %v346
  %v413 = vsel %vm409, %v346, %v348
  %v414 = vsel %vm409, %v348, %v350
  %v415 = vsel %vm409, %v350, %v352
  %v416 = vsel %vm409, %v354, %v356
  %v417 = vsel %vm409, %v356, %v358
  %v418 = vsel %vm409, %v358, %v360
  %v419 = vsel %vm409, %v360, %v362
  %v420 = vsel %vm409, %v362, %v364
  %v421 = vsel %vm409, %v364, %v366
  %v422 = vsel %vm409, %v368, %v370
  %v423 = vsel %vm409, %v370, %v372
  %v424 = vsel %vm409, %v372, %v374
  %v425 = vsel %vm409, %v374, %v376
  %v426 = vsel %vm409, %v376, %v378
  %v427 = vsel %vm409, %v378, %v380
  %v428 = vsel %vm409, %v382, %v384
  %v429 = vsel %vm409, %v384, %v386
  %v430 = vsel %vm409, %v386, %v388
  %v431 = vsel %vm409, %v388, %v390
  %v432 = vsel %vm409, %v390, %v392
  %v433 = vsel %vm409, %v392, %v394
  %v434 = vsel %vm409, %v396, %v398
  %v435 = vsel %vm409, %v398, %v400
  %v436 = vsel %vm409, %v400, %v402
  %v437 = vsel %vm409, %v402, %v404
  %v438 = vsel %vm409, %v404, %v406
  %v439 = vsel %vm409, %v406, %v408
  %vm464 = vcmask 588800
  %v466 = vsel %vm464, %v39, 0
  %vm468 = vcmask 1043456
  %v470 = vsel %vm468, %v434, 0
  %v473 = vsel %vm468, %v435, 0
  %v476 = vsel %vm468, %v436, 0
  %v479 = vsel %vm468, %v437, 0
  %v482 = vsel %vm468, %v438, 0
  %v485 = vsel %vm468, %v439, 0
  %487 = vmatprep.subr.bf16.mxu0 0
  %488 = vmatpush1.bf16.msra.mxu0 0
  %489 = vmatprep.subr.bf16.mxu0 0
  %490 = vmatpush1.bf16.msra.mxu0 0
  %491 = vmatprep.subr.bf16.mxu0 0
  %492 = vmatpush1.bf16.msra.mxu0 0
  %493 = vmatprep.subr.bf16.mxu0 %v473
  %494 = vmatpush1.bf16.msra.mxu0 %v470
  %495 = vmatprep.subr.bf16.mxu0 %v429
  %496 = vmatpush1.bf16.msra.mxu0 %v428
  %497 = vmatprep.subr.bf16.mxu0 %v423
  %498 = vmatpush1.bf16.msra.mxu0 %v422
  %499 = vmatprep.subr.bf16.mxu0 %v417
  %500 = vmatpush1.bf16.msra.mxu0 %v416
  %501 = vmatprep.subr.bf16.mxu0 %v411
  %502 = vmatpush1.bf16.msra.mxu0 %v410
  %503 = vmatprep.subr.bf16.mxu0 0
  %504 = vmatpush2.bf16.msra.mxu0 0
  %505 = vmatprep.subr.bf16.mxu0 0
  %506 = vmatpush2.bf16.msra.mxu0 0
  %507 = vmatprep.subr.bf16.mxu0 0
  %508 = vmatpush2.bf16.msra.mxu0 0
  %509 = vmatprep.subr.bf16.mxu0 0
  %510 = vmatpush2.bf16.msra.mxu0 0
  %511 = vmatprep.subr.bf16.mxu0 0
  %512 = vmatpush2.bf16.msra.mxu0 0
  %513 = vmatprep.subr.bf16.mxu0 0
  %514 = vmatpush2.bf16.msra.mxu0 0
  %515 = vmatprep.subr.bf16.mxu0 0
  %516 = vmatpush2.bf16.msra.mxu0 0
  %517 = vmatprep.subr.bf16.mxu0 0
  %518 = vmatpush2.bf16.msra.mxu0 0
  %519 = vmatprep.mubr.bf16.mxu0 0
  %520 = vmatmul.mubr.bf16.gmra.mxu0 %v466
  %v521 = vpop.f32.mrf.mxu0
  %v522 = vadd.f32 0.0, %v521
  %v523 = vpop.f32.mrf.mxu0
  %v524 = vadd.f32 0.0, %v523
  %v525 = vpop.f32.mrf.mxu0
  %v526 = vpop.f32.mrf.mxu0
  %527 = vdwg.mxu0
  %528 = vmatprep.subr.bf16.mxu0 0
  %529 = vmatpush1.bf16.msra.mxu0 0
  %530 = vmatprep.subr.bf16.mxu0 0
  %531 = vmatpush1.bf16.msra.mxu0 0
  %532 = vmatprep.subr.bf16.mxu0 0
  %533 = vmatpush1.bf16.msra.mxu0 0
  %534 = vmatprep.subr.bf16.mxu0 %v479
  %535 = vmatpush1.bf16.msra.mxu0 %v476
  %536 = vmatprep.subr.bf16.mxu0 %v431
  %537 = vmatpush1.bf16.msra.mxu0 %v430
  %538 = vmatprep.subr.bf16.mxu0 %v425
  %539 = vmatpush1.bf16.msra.mxu0 %v424
  %540 = vmatprep.subr.bf16.mxu0 %v419
  %541 = vmatpush1.bf16.msra.mxu0 %v418
  %542 = vmatprep.subr.bf16.mxu0 %v413
  %543 = vmatpush1.bf16.msra.mxu0 %v412
  %544 = vmatprep.subr.bf16.mxu0 0
  %545 = vmatpush2.bf16.msra.mxu0 0
  %546 = vmatprep.subr.bf16.mxu0 0
  %547 = vmatpush2.bf16.msra.mxu0 0
  %548 = vmatprep.subr.bf16.mxu0 0
  %549 = vmatpush2.bf16.msra.mxu0 0
  %550 = vmatprep.subr.bf16.mxu0 0
  %551 = vmatpush2.bf16.msra.mxu0 0
  %552 = vmatprep.subr.bf16.mxu0 0
  %553 = vmatpush2.bf16.msra.mxu0 0
  %554 = vmatprep.subr.bf16.mxu0 0
  %555 = vmatpush2.bf16.msra.mxu0 0
  %556 = vmatprep.subr.bf16.mxu0 0
  %557 = vmatpush2.bf16.msra.mxu0 0
  %558 = vmatprep.subr.bf16.mxu0 0
  %559 = vmatpush2.bf16.msra.mxu0 0
  %560 = vmatprep.mubr.bf16.mxu0 0
  %561 = vmatmul.mubr.bf16.gmra.mxu0 %v466
  %v562 = vpop.f32.mrf.mxu0
  %v563 = vadd.f32 0.0, %v562
  %v564 = vpop.f32.mrf.mxu0
  %v565 = vadd.f32 0.0, %v564
  %v566 = vpop.f32.mrf.mxu0
  %v567 = vpop.f32.mrf.mxu0
  %568 = vdwg.mxu0
  %569 = vmatprep.subr.bf16.mxu0 0
  %570 = vmatpush1.bf16.msra.mxu0 0
  %571 = vmatprep.subr.bf16.mxu0 0
  %572 = vmatpush1.bf16.msra.mxu0 0
  %573 = vmatprep.subr.bf16.mxu0 0
  %574 = vmatpush1.bf16.msra.mxu0 0
  %575 = vmatprep.subr.bf16.mxu0 %v485
  %576 = vmatpush1.bf16.msra.mxu0 %v482
  %577 = vmatprep.subr.bf16.mxu0 %v433
  %578 = vmatpush1.bf16.msra.mxu0 %v432
  %579 = vmatprep.subr.bf16.mxu0 %v427
  %580 = vmatpush1.bf16.msra.mxu0 %v426
  %581 = vmatprep.subr.bf16.mxu0 %v421
  %582 = vmatpush1.bf16.msra.mxu0 %v420
  %583 = vmatprep.subr.bf16.mxu0 %v415
  %584 = vmatpush1.bf16.msra.mxu0 %v414
  %585 = vmatprep.subr.bf16.mxu0 0
  %586 = vmatpush2.bf16.msra.mxu0 0
  %587 = vmatprep.subr.bf16.mxu0 0
  %588 = vmatpush2.bf16.msra.mxu0 0
  %589 = vmatprep.subr.bf16.mxu0 0
  %590 = vmatpush2.bf16.msra.mxu0 0
  %591 = vmatprep.subr.bf16.mxu0 0
  %592 = vmatpush2.bf16.msra.mxu0 0
  %593 = vmatprep.subr.bf16.mxu0 0
  %594 = vmatpush2.bf16.msra.mxu0 0
  %595 = vmatprep.subr.bf16.mxu0 0
  %596 = vmatpush2.bf16.msra.mxu0 0
  %597 = vmatprep.subr.bf16.mxu0 0
  %598 = vmatpush2.bf16.msra.mxu0 0
  %599 = vmatprep.subr.bf16.mxu0 0
  %600 = vmatpush2.bf16.msra.mxu0 0
  %601 = vmatprep.mubr.bf16.mxu0 0
  %602 = vmatmul.mubr.bf16.gmra.mxu0 %v466
  %v603 = vpop.f32.mrf.mxu0
  %v604 = vadd.f32 0.0, %v603
  %v605 = vpop.f32.mrf.mxu0
  %v606 = vadd.f32 0.0, %v605
  %v607 = vpop.f32.mrf.mxu0
  %v608 = vpop.f32.mrf.mxu0
  %609 = vdwg.mxu0
  %v610 = vld [vmem:[%s3] sm:$0xff]
  %612 = vset.pattern.permute.xlu0 0
  %613 = vperm.xlu0 %612, %v610
  %v614 = vpop.permute.xlu0 %613
  %v616 = vmul.f32 %v522, %v614
  %v617 = vmul.f32 %v524, %v614
  %v618 = vmul.f32 %v563, %v614
  %v619 = vmul.f32 %v565, %v614
  %v620 = vmul.f32 %v604, %v614
  %v621 = vmul.f32 %v606, %v614
  %v622 = vld [vmem:[%s4] sm:$0xff]
  %624 = vset.pattern.permute.xlu0 0
  %625 = vperm.xlu0 %624, %v622
  %v626 = vpop.permute.xlu0 %625
  %v628 = vadd.f32 %v616, %v626
  %v629 = vadd.f32 %v617, %v626
  %v630 = vadd.f32 %v618, %v626
  %v631 = vadd.f32 %v619, %v626
  %v632 = vadd.f32 %v620, %v626
  %v633 = vadd.f32 %v621, %v626
  %v634 = vmax.f32 %v628, 0.0
  %v635 = vmax.f32 %v629, 0.0
  %v636 = vmax.f32 %v630, 0.0
  %v637 = vmax.f32 %v631, 0.0
  %v638 = vmax.f32 %v632, 0.0
  %v639 = vmax.f32 %v633, 0.0
  %v641 = vlaneseq
  %v642 = vshrl.u32 %v641, 7
  %v643 = vsub.s32 0, %v642
  %v644 = vrot.slane %v38, %v643
  %v645 = vlaneseq
  %v646 = vshrl.u32 %v645, 7
  %v647 = vsub.s32 1, %v646
  %v648 = vrot.slane %v38, %v647
  %v649 = vlaneseq
  %v650 = vshrl.u32 %v649, 7
  %v651 = vsub.s32 2, %v650
  %v652 = vrot.slane %v38, %v651
  %v653 = vlaneseq
  %v654 = vshrl.u32 %v653, 7
  %v655 = vsub.s32 3, %v654
  %v656 = vrot.slane %v38, %v655
  %v657 = vlaneseq
  %v658 = vshrl.u32 %v657, 7
  %v659 = vsub.s32 4, %v658
  %v660 = vrot.slane %v38, %v659
  %v661 = vlaneseq
  %v662 = vshrl.u32 %v661, 7
  %v663 = vsub.s32 5, %v662
  %v664 = vrot.slane %v38, %v663
  %v671 = vmul.f32 %v634, %v644
  %v672 = vmul.f32 %v635, %v648
  %v673 = vmul.f32 %v636, %v652
  %v674 = vmul.f32 %v637, %v656
  %v675 = vmul.f32 %v638, %v660
  %v676 = vmul.f32 %v639, %v664
  %v677 = vld [vmem:[%s5] sm:$0xf]
  %685 = vrot.lane.b32.xlu0 0.0, 127
  %v686 = vpop.permute.xlu0 %685
  %687 = vrot.lane.b32.xlu0 %v671, 127
  %v688 = vpop.permute.xlu0 %687
  %689 = vrot.lane.b32.xlu0 %v672, 127
  %v690 = vpop.permute.xlu0 %689
  %691 = vrot.lane.b32.xlu0 %v673, 127
  %v692 = vpop.permute.xlu0 %691
  %693 = vrot.lane.b32.xlu0 %v674, 127
  %v694 = vpop.permute.xlu0 %693
  %695 = vrot.lane.b32.xlu0 %v675, 127
  %v696 = vpop.permute.xlu0 %695
  %697 = vrot.lane.b32.xlu0 %v676, 127
  %v698 = vpop.permute.xlu0 %697
  %v699 = vsel %vm61, %v686, %v688
  %v700 = vsel %vm61, %v688, %v690
  %v701 = vsel %vm61, %v690, %v692
  %v702 = vsel %vm61, %v692, %v694
  %v703 = vsel %vm61, %v694, %v696
  %v704 = vsel %vm61, %v696, %v698
  %712 = vrot.lane.b32.xlu0 0.0, 126
  %v713 = vpop.permute.xlu0 %712
  %714 = vrot.lane.b32.xlu0 %v671, 126
  %v715 = vpop.permute.xlu0 %714
  %716 = vrot.lane.b32.xlu0 %v672, 126
  %v717 = vpop.permute.xlu0 %716
  %718 = vrot.lane.b32.xlu0 %v673, 126
  %v719 = vpop.permute.xlu0 %718
  %720 = vrot.lane.b32.xlu0 %v674, 126
  %v721 = vpop.permute.xlu0 %720
  %722 = vrot.lane.b32.xlu0 %v675, 126
  %v723 = vpop.permute.xlu0 %722
  %724 = vrot.lane.b32.xlu0 %v676, 126
  %v725 = vpop.permute.xlu0 %724
  %v726 = vsel %vm89, %v713, %v715
  %v727 = vsel %vm89, %v715, %v717
  %v728 = vsel %vm89, %v717, %v719
  %v729 = vsel %vm89, %v719, %v721
  %v730 = vsel %vm89, %v721, %v723
  %v731 = vsel %vm89, %v723, %v725
  %739 = vrot.lane.b32.xlu0 0.0, 110
  %v740 = vpop.permute.xlu0 %739
  %741 = vrot.lane.b32.xlu0 %v671, 110
  %v742 = vpop.permute.xlu0 %741
  %743 = vrot.lane.b32.xlu0 %v672, 110
  %v744 = vpop.permute.xlu0 %743
  %745 = vrot.lane.b32.xlu0 %v673, 110
  %v746 = vpop.permute.xlu0 %745
  %747 = vrot.lane.b32.xlu0 %v674, 110
  %v748 = vpop.permute.xlu0 %747
  %749 = vrot.lane.b32.xlu0 %v675, 110
  %v750 = vpop.permute.xlu0 %749
  %751 = vrot.lane.b32.xlu0 %v676, 110
  %v752 = vpop.permute.xlu0 %751
  %v753 = vsel %vm117, %v740, %v742
  %v754 = vsel %vm117, %v742, %v744
  %v755 = vsel %vm117, %v744, %v746
  %v756 = vsel %vm117, %v746, %v748
  %v757 = vsel %vm117, %v748, %v750
  %v758 = vsel %vm117, %v750, %v752
  %766 = vrot.lane.b32.xlu0 %v671, 109
  %v767 = vpop.permute.xlu0 %766
  %768 = vrot.lane.b32.xlu0 %v672, 109
  %v769 = vpop.permute.xlu0 %768
  %770 = vrot.lane.b32.xlu0 %v673, 109
  %v771 = vpop.permute.xlu0 %770
  %772 = vrot.lane.b32.xlu0 %v674, 109
  %v773 = vpop.permute.xlu0 %772
  %774 = vrot.lane.b32.xlu0 %v675, 109
  %v775 = vpop.permute.xlu0 %774
  %776 = vrot.lane.b32.xlu0 %v676, 109
  %v777 = vpop.permute.xlu0 %776
  %v778 = vsel %vm143, %v767, %v769
  %v779 = vsel %vm143, %v769, %v771
  %v780 = vsel %vm143, %v771, %v773
  %v781 = vsel %vm143, %v773, %v775
  %v782 = vsel %vm143, %v775, %v777
  %790 = vrot.lane.b32.xlu0 %v671, 108
  %v791 = vpop.permute.xlu0 %790
  %792 = vrot.lane.b32.xlu0 %v672, 108
  %v793 = vpop.permute.xlu0 %792
  %794 = vrot.lane.b32.xlu0 %v673, 108
  %v795 = vpop.permute.xlu0 %794
  %796 = vrot.lane.b32.xlu0 %v674, 108
  %v797 = vpop.permute.xlu0 %796
  %798 = vrot.lane.b32.xlu0 %v675, 108
  %v799 = vpop.permute.xlu0 %798
  %800 = vrot.lane.b32.xlu0 %v676, 108
  %v801 = vpop.permute.xlu0 %800
  %802 = vrot.lane.b32.xlu0 0.0, 108
  %v803 = vpop.permute.xlu0 %802
  %v804 = vsel %vm171, %v791, %v793
  %v805 = vsel %vm171, %v793, %v795
  %v806 = vsel %vm171, %v795, %v797
  %v807 = vsel %vm171, %v797, %v799
  %v808 = vsel %vm171, %v799, %v801
  %v809 = vsel %vm171, %v801, %v803
  %817 = vrot.lane.b32.xlu0 %v671, 92
  %v818 = vpop.permute.xlu0 %817
  %819 = vrot.lane.b32.xlu0 %v672, 92
  %v820 = vpop.permute.xlu0 %819
  %821 = vrot.lane.b32.xlu0 %v673, 92
  %v822 = vpop.permute.xlu0 %821
  %823 = vrot.lane.b32.xlu0 %v674, 92
  %v824 = vpop.permute.xlu0 %823
  %825 = vrot.lane.b32.xlu0 %v675, 92
  %v826 = vpop.permute.xlu0 %825
  %827 = vrot.lane.b32.xlu0 %v676, 92
  %v828 = vpop.permute.xlu0 %827
  %829 = vrot.lane.b32.xlu0 0.0, 92
  %v830 = vpop.permute.xlu0 %829
  %v831 = vsel %vm199, %v818, %v820
  %v832 = vsel %vm199, %v820, %v822
  %v833 = vsel %vm199, %v822, %v824
  %v834 = vsel %vm199, %v824, %v826
  %v835 = vsel %vm199, %v826, %v828
  %v836 = vsel %vm199, %v828, %v830
  %844 = vrot.lane.b32.xlu0 %v671, 91
  %v845 = vpop.permute.xlu0 %844
  %846 = vrot.lane.b32.xlu0 %v672, 91
  %v847 = vpop.permute.xlu0 %846
  %848 = vrot.lane.b32.xlu0 %v673, 91
  %v849 = vpop.permute.xlu0 %848
  %850 = vrot.lane.b32.xlu0 %v674, 91
  %v851 = vpop.permute.xlu0 %850
  %852 = vrot.lane.b32.xlu0 %v675, 91
  %v853 = vpop.permute.xlu0 %852
  %854 = vrot.lane.b32.xlu0 %v676, 91
  %v855 = vpop.permute.xlu0 %854
  %856 = vrot.lane.b32.xlu0 0.0, 91
  %v857 = vpop.permute.xlu0 %856
  %v858 = vsel %vm227, %v845, %v847
  %v859 = vsel %vm227, %v847, %v849
  %v860 = vsel %vm227, %v849, %v851
  %v861 = vsel %vm227, %v851, %v853
  %v862 = vsel %vm227, %v853, %v855
  %v863 = vsel %vm227, %v855, %v857
  %871 = vrot.lane.b32.xlu0 %v671, 90
  %v872 = vpop.permute.xlu0 %871
  %873 = vrot.lane.b32.xlu0 %v672, 90
  %v874 = vpop.permute.xlu0 %873
  %875 = vrot.lane.b32.xlu0 %v673, 90
  %v876 = vpop.permute.xlu0 %875
  %877 = vrot.lane.b32.xlu0 %v674, 90
  %v878 = vpop.permute.xlu0 %877
  %879 = vrot.lane.b32.xlu0 %v675, 90
  %v880 = vpop.permute.xlu0 %879
  %881 = vrot.lane.b32.xlu0 %v676, 90
  %v882 = vpop.permute.xlu0 %881
  %883 = vrot.lane.b32.xlu0 0.0, 90
  %v884 = vpop.permute.xlu0 %883
  %v885 = vsel %vm255, %v872, %v874
  %v886 = vsel %vm255, %v874, %v876
  %v887 = vsel %vm255, %v876, %v878
  %v888 = vsel %vm255, %v878, %v880
  %v889 = vsel %vm255, %v880, %v882
  %v890 = vsel %vm255, %v882, %v884
  %v898 = vpack.c.bf16 %v699, 0.0
  %v899 = vpack.c.bf16 %v700, %v671
  %v900 = vpack.c.bf16 %v701, %v672
  %v901 = vpack.c.bf16 %v702, %v673
  %v902 = vpack.c.bf16 %v703, %v674
  %v903 = vpack.c.bf16 %v704, %v675
  %v904 = vpack.c.bf16 %v698, %v676
  %v905 = vpack.c.bf16 %v753, %v726
  %v906 = vpack.c.bf16 %v754, %v727
  %v907 = vpack.c.bf16 %v755, %v728
  %v908 = vpack.c.bf16 %v756, %v729
  %v909 = vpack.c.bf16 %v757, %v730
  %v910 = vpack.c.bf16 %v758, %v731
  %v911 = vpack.c.bf16 %v752, %v725
  %v912 = vpack.c.bf16 %v791, %v767
  %v913 = vpack.c.bf16 %v804, %v778
  %v914 = vpack.c.bf16 %v805, %v779
  %v915 = vpack.c.bf16 %v806, %v780
  %v916 = vpack.c.bf16 %v807, %v781
  %v917 = vpack.c.bf16 %v808, %v782
  %v918 = vpack.c.bf16 %v809, %v777
  %v919 = vpack.c.bf16 %v845, %v818
  %v920 = vpack.c.bf16 %v858, %v831
  %v921 = vpack.c.bf16 %v859, %v832
  %v922 = vpack.c.bf16 %v860, %v833
  %v923 = vpack.c.bf16 %v861, %v834
  %v924 = vpack.c.bf16 %v862, %v835
  %v925 = vpack.c.bf16 %v863, %v836
  %v926 = vpack.c.bf16 %v872, %v872
  %v927 = vpack.c.bf16 %v885, %v885
  %v928 = vpack.c.bf16 %v886, %v886
  %v929 = vpack.c.bf16 %v887, %v887
  %v930 = vpack.c.bf16 %v888, %v888
  %v931 = vpack.c.bf16 %v889, %v889
  %v932 = vpack.c.bf16 %v890, %v890
  %968 = vrot.lane.b32.xlu0 %v898, 19
  %v969 = vpop.permute.xlu0 %968
  %970 = vrot.lane.b32.xlu0 %v899, 19
  %v971 = vpop.permute.xlu0 %970
  %972 = vrot.lane.b32.xlu0 %v900, 19
  %v973 = vpop.permute.xlu0 %972
  %974 = vrot.lane.b32.xlu0 %v901, 19
  %v975 = vpop.permute.xlu0 %974
  %976 = vrot.lane.b32.xlu0 %v902, 19
  %v977 = vpop.permute.xlu0 %976
  %978 = vrot.lane.b32.xlu0 %v903, 19
  %v979 = vpop.permute.xlu0 %978
  %980 = vrot.lane.b32.xlu0 %v904, 19
  %v981 = vpop.permute.xlu0 %980
  %982 = vrot.lane.b32.xlu0 %v905, 19
  %v983 = vpop.permute.xlu0 %982
  %984 = vrot.lane.b32.xlu0 %v906, 19
  %v985 = vpop.permute.xlu0 %984
  %986 = vrot.lane.b32.xlu0 %v907, 19
  %v987 = vpop.permute.xlu0 %986
  %988 = vrot.lane.b32.xlu0 %v908, 19
  %v989 = vpop.permute.xlu0 %988
  %990 = vrot.lane.b32.xlu0 %v909, 19
  %v991 = vpop.permute.xlu0 %990
  %992 = vrot.lane.b32.xlu0 %v910, 19
  %v993 = vpop.permute.xlu0 %992
  %994 = vrot.lane.b32.xlu0 %v911, 19
  %v995 = vpop.permute.xlu0 %994
  %996 = vrot.lane.b32.xlu0 %v912, 19
  %v997 = vpop.permute.xlu0 %996
  %998 = vrot.lane.b32.xlu0 %v913, 19
  %v999 = vpop.permute.xlu0 %998
  %1000 = vrot.lane.b32.xlu0 %v914, 19
  %v1001 = vpop.permute.xlu0 %1000
  %1002 = vrot.lane.b32.xlu0 %v915, 19
  %v1003 = vpop.permute.xlu0 %1002
  %1004 = vrot.lane.b32.xlu0 %v916, 19
  %v1005 = vpop.permute.xlu0 %1004
  %1006 = vrot.lane.b32.xlu0 %v917, 19
  %v1007 = vpop.permute.xlu0 %1006
  %1008 = vrot.lane.b32.xlu0 %v918, 19
  %v1009 = vpop.permute.xlu0 %1008
  %1010 = vrot.lane.b32.xlu0 %v919, 19
  %v1011 = vpop.permute.xlu0 %1010
  %1012 = vrot.lane.b32.xlu0 %v920, 19
  %v1013 = vpop.permute.xlu0 %1012
  %1014 = vrot.lane.b32.xlu0 %v921, 19
  %v1015 = vpop.permute.xlu0 %1014
  %1016 = vrot.lane.b32.xlu0 %v922, 19
  %v1017 = vpop.permute.xlu0 %1016
  %1018 = vrot.lane.b32.xlu0 %v923, 19
  %v1019 = vpop.permute.xlu0 %1018
  %1020 = vrot.lane.b32.xlu0 %v924, 19
  %v1021 = vpop.permute.xlu0 %1020
  %1022 = vrot.lane.b32.xlu0 %v925, 19
  %v1023 = vpop.permute.xlu0 %1022
  %1024 = vrot.lane.b32.xlu0 %v926, 19
  %v1025 = vpop.permute.xlu0 %1024
  %1026 = vrot.lane.b32.xlu0 %v927, 19
  %v1027 = vpop.permute.xlu0 %1026
  %1028 = vrot.lane.b32.xlu0 %v928, 19
  %v1029 = vpop.permute.xlu0 %1028
  %1030 = vrot.lane.b32.xlu0 %v929, 19
  %v1031 = vpop.permute.xlu0 %1030
  %1032 = vrot.lane.b32.xlu0 %v930, 19
  %v1033 = vpop.permute.xlu0 %1032
  %1034 = vrot.lane.b32.xlu0 %v931, 19
  %v1035 = vpop.permute.xlu0 %1034
  %1036 = vrot.lane.b32.xlu0 %v932, 19
  %v1037 = vpop.permute.xlu0 %1036
  %v1038 = vsel %vm409, %v969, %v971
  %v1039 = vsel %vm409, %v971, %v973
  %v1040 = vsel %vm409, %v973, %v975
  %v1041 = vsel %vm409, %v975, %v977
  %v1042 = vsel %vm409, %v977, %v979
  %v1043 = vsel %vm409, %v979, %v981
  %v1044 = vsel %vm409, %v983, %v985
  %v1045 = vsel %vm409, %v985, %v987
  %v1046 = vsel %vm409, %v987, %v989
  %v1047 = vsel %vm409, %v989, %v991
  %v1048 = vsel %vm409, %v991, %v993
  %v1049 = vsel %vm409, %v993, %v995
  %v1050 = vsel %vm409, %v997, %v999
  %v1051 = vsel %vm409, %v999, %v1001
  %v1052 = vsel %vm409, %v1001, %v1003
  %v1053 = vsel %vm409, %v1003, %v1005
  %v1054 = vsel %vm409, %v1005, %v1007
  %v1055 = vsel %vm409, %v1007, %v1009
  %v1056 = vsel %vm409, %v1011, %v1013
  %v1057 = vsel %vm409, %v1013, %v1015
  %v1058 = vsel %vm409, %v1015, %v1017
  %v1059 = vsel %vm409, %v1017, %v1019
  %v1060 = vsel %vm409, %v1019, %v1021
  %v1061 = vsel %vm409, %v1021, %v1023
  %v1062 = vsel %vm409, %v1025, %v1027
  %v1063 = vsel %vm409, %v1027, %v1029
  %v1064 = vsel %vm409, %v1029, %v1031
  %v1065 = vsel %vm409, %v1031, %v1033
  %v1066 = vsel %vm409, %v1033, %v1035
  %v1067 = vsel %vm409, %v1035, %v1037
  %v1093 = vsel %vm464, %v677, 0
  %v1096 = vsel %vm468, %v1062, 0
  %v1099 = vsel %vm468, %v1063, 0
  %v1102 = vsel %vm468, %v1064, 0
  %v1105 = vsel %vm468, %v1065, 0
  %v1108 = vsel %vm468, %v1066, 0
  %v1111 = vsel %vm468, %v1067, 0
  %1113 = vmatprep.subr.bf16.mxu0 0
  %1114 = vmatpush1.bf16.msra.mxu0 0
  %1115 = vmatprep.subr.bf16.mxu0 0
  %1116 = vmatpush1.bf16.msra.mxu0 0
  %1117 = vmatprep.subr.bf16.mxu0 0
  %1118 = vmatpush1.bf16.msra.mxu0 0
  %1119 = vmatprep.subr.bf16.mxu0 %v1099
  %1120 = vmatpush1.bf16.msra.mxu0 %v1096
  %1121 = vmatprep.subr.bf16.mxu0 %v1057
  %1122 = vmatpush1.bf16.msra.mxu0 %v1056
  %1123 = vmatprep.subr.bf16.mxu0 %v1051
  %1124 = vmatpush1.bf16.msra.mxu0 %v1050
  %1125 = vmatprep.subr.bf16.mxu0 %v1045
  %1126 = vmatpush1.bf16.msra.mxu0 %v1044
  %1127 = vmatprep.subr.bf16.mxu0 %v1039
  %1128 = vmatpush1.bf16.msra.mxu0 %v1038
  %1129 = vmatprep.subr.bf16.mxu0 0
  %1130 = vmatpush2.bf16.msra.mxu0 0
  %1131 = vmatprep.subr.bf16.mxu0 0
  %1132 = vmatpush2.bf16.msra.mxu0 0
  %1133 = vmatprep.subr.bf16.mxu0 0
  %1134 = vmatpush2.bf16.msra.mxu0 0
  %1135 = vmatprep.subr.bf16.mxu0 0
  %1136 = vmatpush2.bf16.msra.mxu0 0
  %1137 = vmatprep.subr.bf16.mxu0 0
  %1138 = vmatpush2.bf16.msra.mxu0 0
  %1139 = vmatprep.subr.bf16.mxu0 0
  %1140 = vmatpush2.bf16.msra.mxu0 0
  %1141 = vmatprep.subr.bf16.mxu0 0
  %1142 = vmatpush2.bf16.msra.mxu0 0
  %1143 = vmatprep.subr.bf16.mxu0 0
  %1144 = vmatpush2.bf16.msra.mxu0 0
  %1145 = vmatprep.mubr.bf16.mxu0 0
  %1146 = vmatmul.mubr.bf16.gmra.mxu0 %v1093
  %v1147 = vpop.f32.mrf.mxu0
  %v1148 = vadd.f32 0.0, %v1147
  %v1149 = vpop.f32.mrf.mxu0
  %v1150 = vadd.f32 0.0, %v1149
  %v1151 = vpop.f32.mrf.mxu0
  %v1152 = vpop.f32.mrf.mxu0
  %1153 = vdwg.mxu0
  %1154 = vmatprep.subr.bf16.mxu0 0
  %1155 = vmatpush1.bf16.msra.mxu0 0
  %1156 = vmatprep.subr.bf16.mxu0 0
  %1157 = vmatpush1.bf16.msra.mxu0 0
  %1158 = vmatprep.subr.bf16.mxu0 0
  %1159 = vmatpush1.bf16.msra.mxu0 0
  %1160 = vmatprep.subr.bf16.mxu0 %v1105
  %1161 = vmatpush1.bf16.msra.mxu0 %v1102
  %1162 = vmatprep.subr.bf16.mxu0 %v1059
  %1163 = vmatpush1.bf16.msra.mxu0 %v1058
  %1164 = vmatprep.subr.bf16.mxu0 %v1053
  %1165 = vmatpush1.bf16.msra.mxu0 %v1052
  %1166 = vmatprep.subr.bf16.mxu0 %v1047
  %1167 = vmatpush1.bf16.msra.mxu0 %v1046
  %1168 = vmatprep.subr.bf16.mxu0 %v1041
  %1169 = vmatpush1.bf16.msra.mxu0 %v1040
  %1170 = vmatprep.subr.bf16.mxu0 0
  %1171 = vmatpush2.bf16.msra.mxu0 0
  %1172 = vmatprep.subr.bf16.mxu0 0
  %1173 = vmatpush2.bf16.msra.mxu0 0
  %1174 = vmatprep.subr.bf16.mxu0 0
  %1175 = vmatpush2.bf16.msra.mxu0 0
  %1176 = vmatprep.subr.bf16.mxu0 0
  %1177 = vmatpush2.bf16.msra.mxu0 0
  %1178 = vmatprep.subr.bf16.mxu0 0
  %1179 = vmatpush2.bf16.msra.mxu0 0
  %1180 = vmatprep.subr.bf16.mxu0 0
  %1181 = vmatpush2.bf16.msra.mxu0 0
  %1182 = vmatprep.subr.bf16.mxu0 0
  %1183 = vmatpush2.bf16.msra.mxu0 0
  %1184 = vmatprep.subr.bf16.mxu0 0
  %1185 = vmatpush2.bf16.msra.mxu0 0
  %1186 = vmatprep.mubr.bf16.mxu0 0
  %1187 = vmatmul.mubr.bf16.gmra.mxu0 %v1093
  %v1188 = vpop.f32.mrf.mxu0
  %v1189 = vadd.f32 0.0, %v1188
  %v1190 = vpop.f32.mrf.mxu0
  %v1191 = vadd.f32 0.0, %v1190
  %v1192 = vpop.f32.mrf.mxu0
  %v1193 = vpop.f32.mrf.mxu0
  %1194 = vdwg.mxu0
  %1195 = vmatprep.subr.bf16.mxu0 0
  %1196 = vmatpush1.bf16.msra.mxu0 0
  %1197 = vmatprep.subr.bf16.mxu0 0
  %1198 = vmatpush1.bf16.msra.mxu0 0
  %1199 = vmatprep.subr.bf16.mxu0 0
  %1200 = vmatpush1.bf16.msra.mxu0 0
  %1201 = vmatprep.subr.bf16.mxu0 %v1111
  %1202 = vmatpush1.bf16.msra.mxu0 %v1108
  %1203 = vmatprep.subr.bf16.mxu0 %v1061
  %1204 = vmatpush1.bf16.msra.mxu0 %v1060
  %1205 = vmatprep.subr.bf16.mxu0 %v1055
  %1206 = vmatpush1.bf16.msra.mxu0 %v1054
  %1207 = vmatprep.subr.bf16.mxu0 %v1049
  %1208 = vmatpush1.bf16.msra.mxu0 %v1048
  %1209 = vmatprep.subr.bf16.mxu0 %v1043
  %1210 = vmatpush1.bf16.msra.mxu0 %v1042
  %1211 = vmatprep.subr.bf16.mxu0 0
  %1212 = vmatpush2.bf16.msra.mxu0 0
  %1213 = vmatprep.subr.bf16.mxu0 0
  %1214 = vmatpush2.bf16.msra.mxu0 0
  %1215 = vmatprep.subr.bf16.mxu0 0
  %1216 = vmatpush2.bf16.msra.mxu0 0
  %1217 = vmatprep.subr.bf16.mxu0 0
  %1218 = vmatpush2.bf16.msra.mxu0 0
  %1219 = vmatprep.subr.bf16.mxu0 0
  %1220 = vmatpush2.bf16.msra.mxu0 0
  %1221 = vmatprep.subr.bf16.mxu0 0
  %1222 = vmatpush2.bf16.msra.mxu0 0
  %1223 = vmatprep.subr.bf16.mxu0 0
  %1224 = vmatpush2.bf16.msra.mxu0 0
  %1225 = vmatprep.subr.bf16.mxu0 0
  %1226 = vmatpush2.bf16.msra.mxu0 0
  %1227 = vmatprep.mubr.bf16.mxu0 0
  %1228 = vmatmul.mubr.bf16.gmra.mxu0 %v1093
  %v1229 = vpop.f32.mrf.mxu0
  %v1230 = vadd.f32 0.0, %v1229
  %v1231 = vpop.f32.mrf.mxu0
  %v1232 = vadd.f32 0.0, %v1231
  %v1233 = vpop.f32.mrf.mxu0
  %v1234 = vpop.f32.mrf.mxu0
  %1235 = vdwg.mxu0
  %v1236 = vld [vmem:[%s6] sm:$0xff]
  %1238 = vset.pattern.permute.xlu0 0
  %1239 = vperm.xlu0 %1238, %v1236
  %v1240 = vpop.permute.xlu0 %1239
  %v1242 = vmul.f32 %v1148, %v1240
  %v1243 = vmul.f32 %v1150, %v1240
  %v1244 = vmul.f32 %v1189, %v1240
  %v1245 = vmul.f32 %v1191, %v1240
  %v1246 = vmul.f32 %v1230, %v1240
  %v1247 = vmul.f32 %v1232, %v1240
  %v1248 = vld [vmem:[%s7] sm:$0xff]
  %1250 = vset.pattern.permute.xlu0 0
  %1251 = vperm.xlu0 %1250, %v1248
  %v1252 = vpop.permute.xlu0 %1251
  %v1254 = vadd.f32 %v1242, %v1252
  %v1255 = vadd.f32 %v1243, %v1252
  %v1256 = vadd.f32 %v1244, %v1252
  %v1257 = vadd.f32 %v1245, %v1252
  %v1258 = vadd.f32 %v1246, %v1252
  %v1259 = vadd.f32 %v1247, %v1252
  %v1260 = vadd.f32 %v1254, %v31
  %v1261 = vadd.f32 %v1255, %v32
  %v1262 = vadd.f32 %v1256, %v33
  %v1263 = vadd.f32 %v1257, %v34
  %v1264 = vadd.f32 %v1258, %v35
  %v1265 = vadd.f32 %v1259, %v36
  %v1266 = vmax.f32 %v1260, 0.0
  %v1267 = vmax.f32 %v1261, 0.0
  %v1268 = vmax.f32 %v1262, 0.0
  %v1269 = vmax.f32 %v1263, 0.0
  %v1270 = vmax.f32 %v1264, 0.0
  %v1271 = vmax.f32 %v1265, 0.0
  %1272 = vst [vmem:[%s8] sm:$0xff] %v1266
  %1273 = vst [vmem:[%s8 + $0x8] sm:$0xff] %v1267
  %1274 = vst [vmem:[%s8 + $0x10] sm:$0xff] %v1268
  %1275 = vst [vmem:[%s8 + $0x18] sm:$0xff] %v1269
  %1276 = vst [vmem:[%s8 + $0x20] sm:$0xff] %v1270
  %1277 = vst [vmem:[%s8 + $0x28] sm:$0xff] %v1271
  // Predicated region
  $region34: #{basic_block_forward.1} parent=0 // pred_check
    _
  $region35: #{basic_block_forward.1} parent=0 // pred_check_branch
    %1279 = sbr.rel (0) target = $region37
  $region36: #{basic_block_forward.1} parent=0 // pred_region
    _
  $region37: #{basic_block_forward.1} parent=0 // pred_fallthru
    _
  // Predicated region
  $region38: #{basic_block_forward.1} parent=0 // pred_check
    _
  $region39: #{basic_block_forward.1} parent=0 // pred_check_branch
    %1281 = sbr.rel (0) target = $region41
  $region40: #{basic_block_forward.1} parent=0 // pred_region
    _
  $region41: #{basic_block_forward.1} parent=0 // pred_fallthru
    _

</llo_original>
